<compile_context>
chip_gen: v7x
topology: tpu7x:2x2x1
jax: 0.10.0
libtpu: 0.0.40
codegen_flags: <defaults>
</compile_context>

<pallas_src>
import functools

import jax
import jax.numpy as jnp
from jax import lax
from jax.experimental import pallas as pl
from jax.experimental.pallas import tpu as pltpu


# ----------------------------------------------------------------------------
# Hardware / tiling helpers
# ----------------------------------------------------------------------------
def _round_up(x, m):
    return ((x + m - 1) // m) * m


def _hw_config():
    """Generation-aware VMEM limit + TensorCores per chip."""
    try:
        kind = jax.devices()[0].device_kind.lower()
    except Exception:
        kind = ""
    if "v7" in kind or "tpu7" in kind:
        # v7x: 64 MiB physical VMEM, 2 TensorCores per chip.
        return {"vmem_limit": 40 * 1024 * 1024, "n_cores": 2}
    if "v6" in kind or "v5e" in kind or "v5 lite" in kind or "v5lite" in kind:
        # v5e / v6e: 128 MiB physical VMEM, 1 TensorCore per chip.
        return {"vmem_limit": 96 * 1024 * 1024, "n_cores": 1}
    # Unknown generation: conservative settings that compile everywhere.
    return {"vmem_limit": 32 * 1024 * 1024, "n_cores": 1}


def _pick_block(dim, target, max_rows):
    """Largest divisor of `dim` that is a multiple of 8 and <= min(target, max_rows).

    Falls back to the full dim (always a legal block shape) when no aligned
    divisor exists (dim < 8 or prime-ish dims)."""
    cap = min(int(dim), max(8, min(int(target), int(max_rows))))
    cap -= cap % 8
    d = cap
    while d >= 8:
        if dim % d == 0:
            return d
        d -= 8
    return dim


def _pad_to(a, shape):
    """Zero-pad a 2-D array up to `shape` (trailing padding only)."""
    pads = [(0, s - d) for d, s in zip(a.shape, shape)]
    if all(p == (0, 0) for p in pads):
        return a
    return jnp.pad(a, pads)


# ----------------------------------------------------------------------------
# Kernel 1: fused time-distributed projection
#   pre = relu(x @ W_spatial + b_spatial) @ W_ih + b_rnn
# Tiled over M = T*B rows (time-major), grid axis "parallel".
# ----------------------------------------------------------------------------
def _proj_kernel(x_ref, ws_ref, bs_ref, wih_ref, brnn_ref, pre_ref):
    cdt = ws_ref.dtype
    h = jnp.dot(x_ref[...], ws_ref[...], preferred_element_type=jnp.float32)
    h = jnp.maximum(h + bs_ref[...], 0.0)                      # f32 add/relu
    pre = jnp.dot(h.astype(cdt), wih_ref[...], preferred_element_type=jnp.float32)
    pre_ref[...] = (pre + brnn_ref[...]).astype(pre_ref.dtype)


def spatial_input_projection(x2, ws, bs, wih, brnn, *, tm, vmem_limit):
    M, d_in = x2.shape
    hs_p = ws.shape[1]
    ht_p = wih.shape[1]
    itemsize = jnp.dtype(x2.dtype).itemsize
    flops = 2 * M * (d_in * hs_p + hs_p * ht_p)
    bytes_accessed = (
        M * d_in * itemsize + d_in * hs_p * itemsize + hs_p * ht_p * itemsize
        + 4 * (hs_p + ht_p) + M * ht_p * itemsize
    )
    return pl.pallas_call(
        _proj_kernel,
        out_shape=jax.ShapeDtypeStruct((M, ht_p), x2.dtype),
        grid_spec=pltpu.PrefetchScalarGridSpec(
            num_scalar_prefetch=0,
            grid=(M // tm,),
            in_specs=[
                pl.BlockSpec((tm, d_in), lambda i: (i, 0)),
                pl.BlockSpec((d_in, hs_p), lambda i: (0, 0)),
                pl.BlockSpec((1, hs_p), lambda i: (0, 0)),
                pl.BlockSpec((hs_p, ht_p), lambda i: (0, 0)),
                pl.BlockSpec((1, ht_p), lambda i: (0, 0)),
            ],
            out_specs=pl.BlockSpec((tm, ht_p), lambda i: (i, 0)),
        ),
        compiler_params=pltpu.CompilerParams(
            dimension_semantics=("parallel",),
            vmem_limit_bytes=int(vmem_limit),
        ),
        cost_estimate=pl.CostEstimate(
            flops=int(flops), transcendentals=0, bytes_accessed=int(bytes_accessed)
        ),
    )(x2, ws, bs, wih, brnn)


# ----------------------------------------------------------------------------
# Kernel 2: Elman recurrence + fused final Linear (single invocation per
# batch chunk).  Per-step work is ONE fused MXU matmul h @ [W_hh | W_final];
# the output write for step t-1 is deferred to step t, and the last step is
# flushed after the loop.
#   h_t   = tanh(pre_t + h_{t-1} @ W_hh)
#   out_t = h_t @ W_final + b_final
# ----------------------------------------------------------------------------
def _rnn_final_kernel(pre_ref, wcat_ref, bf_ref, o_ref, *, unroll):
    T, bb, ht_p = pre_ref.shape
    cdt = wcat_ref.dtype
    w_cat = wcat_ref[...]                    # (ht_p, ht_p + do_p), resident
    b_f = bf_ref[...]                        # (1, do_p), f32

    # h_0 = tanh(pre_0)  (h_{-1} = 0, so no matmul needed for step 0).
    h0 = jnp.tanh(pre_ref[0].astype(jnp.float32))

    def step(t, h):
        # One fused MXU issue per timestep: z = h_{t-1} @ [W_hh | W_final].
        z = jnp.dot(h.astype(cdt), w_cat, preferred_element_type=jnp.float32)
        # Deferred write: z[:, ht_p:] == h_{t-1} @ W_final -> out_{t-1}.
        o_ref[t - 1] = (z[:, ht_p:] + b_f).astype(o_ref.dtype)
        return jnp.tanh(pre_ref[t].astype(jnp.float32) + z[:, :ht_p])

    h_last = lax.fori_loop(1, T, step, h0, unroll=unroll)
    # Flush the last timestep's output.
    z_f = jnp.dot(h_last.astype(cdt), w_cat[:, ht_p:],
                  preferred_element_type=jnp.float32)
    o_ref[T - 1] = (z_f + b_f).astype(o_ref.dtype)


def rnn_with_final(pre_tm, wcat, bf, *, bb, vmem_limit):
    T, B, ht_p = pre_tm.shape
    do_p = wcat.shape[1] - ht_p
    itemsize = jnp.dtype(pre_tm.dtype).itemsize

    # Cap the unroll by an approximate live-vreg budget (blind unroll=8 at
    # large bb*ht would spill onto the vld/vst slots that stream pre/out).
    per_step_bytes = 4 * bb * (2 * ht_p + do_p)
    trip = max(T - 1, 1)
    unroll = int(max(1, min(8, trip, (96 * 1024) // max(per_step_bytes, 1))))

    flops = 2 * T * B * ht_p * (ht_p + do_p)
    bytes_accessed = (
        T * B * ht_p * itemsize
        + wcat.size * jnp.dtype(wcat.dtype).itemsize
        + 4 * do_p + T * B * do_p * 4
    )
    kernel = functools.partial(_rnn_final_kernel, unroll=unroll)
    return pl.pallas_call(
        kernel,
        out_shape=jax.ShapeDtypeStruct((T, B, do_p), jnp.float32),
        grid_spec=pltpu.PrefetchScalarGridSpec(
            num_scalar_prefetch=0,
            grid=(B // bb,),
            in_specs=[
                pl.BlockSpec((T, bb, ht_p), lambda c: (0, c, 0)),
                pl.BlockSpec((ht_p, ht_p + do_p), lambda c: (0, 0)),
                pl.BlockSpec((1, do_p), lambda c: (0, 0)),
            ],
            out_specs=pl.BlockSpec((T, bb, do_p), lambda c: (0, c, 0)),
        ),
        compiler_params=pltpu.CompilerParams(
            dimension_semantics=("parallel",),   # batch chunks are independent
            vmem_limit_bytes=int(vmem_limit),
        ),
        cost_estimate=pl.CostEstimate(
            flops=int(flops),
            transcendentals=int(T * B * ht_p),
            bytes_accessed=int(bytes_accessed),
        ),
    )(pre_tm, wcat, bf)


# ----------------------------------------------------------------------------
# SpatialTemporalNN forward
# ----------------------------------------------------------------------------
def spatial_temporal_nn(x, params, *, compute_dtype=jnp.float32):
    """x: (B, T, D_in) -> (B, T, D_out). compute_dtype in {float32, bfloat16}."""
    B, T, d_in = x.shape
    hs = params["w_spatial"].shape[1]
    ht = params["w_hh"].shape[0]
    d_out = params["w_final"].shape[1]

    # Pad every lane dimension (H_S, H_T, D_out) up to 128 so all stores are
    # lane-dense (unmasked vst) and MXU columns are full.
    hs_p = _round_up(hs, 128)
    ht_p = _round_up(ht, 128)
    do_p = _round_up(d_out, 128)

    cdt = jnp.dtype(compute_dtype)
    f32 = jnp.float32

    # Zero-padding keeps padded hidden lanes exactly 0 through relu/tanh so
    # they never leak into real lanes across timesteps.
    ws = _pad_to(params["w_spatial"], (d_in, hs_p)).astype(cdt)
    bs = _pad_to(params["b_spatial"], (1, hs_p)).astype(f32)
    wih = _pad_to(params["w_ih"], (hs_p, ht_p)).astype(cdt)
    brnn = _pad_to(params["b_rnn"], (1, ht_p)).astype(f32)
    whh = _pad_to(params["w_hh"], (ht_p, ht_p)).astype(cdt)
    wf = _pad_to(params["w_final"], (ht_p, do_p)).astype(cdt)
    bf = _pad_to(params["b_final"], (1, do_p)).astype(f32)
    wcat = jnp.concatenate([whh, wf], axis=1)          # (ht_p, ht_p + do_p)

    hw = _hw_config()
    vmem_limit = hw["vmem_limit"]
    itemsize = cdt.itemsize

    # Time-major layout for the recurrence; only the raw input / final output
    # are transposed (layout plumbing), all intermediates stay time-major.
    # TODO(synk): fold this transpose into the projection kernel (2-D grid).
    x_tm = jnp.transpose(x, (1, 0, 2)).reshape(T * B, d_in).astype(cdt)

    # ---- fused time-distributed projection --------------------------------
    M = T * B
    weight_vmem = 2 * itemsize * (d_in * hs_p + hs_p * ht_p) + 8 * (hs_p + ht_p)
    row_bytes = 2 * itemsize * (d_in + ht_p)            # double-buffered in+out
    max_rows = max(8, (vmem_limit // 2 - weight_vmem) // max(row_bytes, 1))
    tm = _pick_block(M, 1024, max_rows)
    pre = spatial_input_projection(
        x_tm, ws, bs, wih, brnn, tm=tm, vmem_limit=vmem_limit
    )                                                   # (T*B, ht_p), time-major
    pre_tm = pre.reshape(T, B, ht_p)                    # free reshape

    # ---- recurrence + fused final projection -------------------------------
    row_bytes = 2 * T * (ht_p * itemsize + do_p * 4)    # double-buffered pre+out
    max_rows = max(1, (vmem_limit // 2) // max(row_bytes, 1))
    bb = _pick_block(B, pl.cdiv(B, hw["n_cores"]), max_rows)
    out_tm = rnn_with_final(pre_tm, wcat, bf, bb=bb, vmem_limit=vmem_limit)

    return jnp.transpose(out_tm, (1, 0, 2))[:, :, :d_out]   # (B, T, D_out)


# ----------------------------------------------------------------------------
# Pure-JAX reference (same math) for the correctness check.
# ----------------------------------------------------------------------------
def reference(x, params):
    B, T, d_in = x.shape
    h_s = jnp.maximum(
        x.reshape(B * T, d_in) @ params["w_spatial"] + params["b_spatial"], 0.0
    ).reshape(B, T, -1)

    def step(h, x_t):
        h = jnp.tanh(x_t @ params["w_ih"] + h @ params["w_hh"] + params["b_rnn"])
        return h, h

    ht = params["w_hh"].shape[0]
    _, hs = lax.scan(step, jnp.zeros((B, ht), jnp.float32),
                     jnp.transpose(h_s, (1, 0, 2)))
    hs = jnp.transpose(hs, (1, 0, 2))
    out = hs.reshape(B * T, ht) @ params["w_final"] + params["b_final"]
    return out.reshape(B, T, -1)


def init_params(key, d_in, h_s, h_t, d_out):
    ks = jax.random.split(key, 7)

    def u(k, shape, fan_in):
        lim = 1.0 / jnp.sqrt(fan_in)
        return jax.random.uniform(k, shape, jnp.float32, -lim, lim)

    return {
        "w_spatial": u(ks[0], (d_in, h_s), d_in),
        "b_spatial": u(ks[1], (1, h_s), d_in),
        "w_ih": u(ks[2], (h_s, h_t), h_s),
        "w_hh": u(ks[3], (h_t, h_t), h_t),
        # PyTorch RNN has b_ih + b_hh; fold them into a single bias.
        "b_rnn": u(ks[4], (1, h_t), h_t),
        "w_final": u(ks[5], (h_t, d_out), h_t),
        "b_final": u(ks[6], (1, d_out), h_t),
    }


if __name__ == "__main__":
    B, T, D_in, H_S, H_T, D_out = 2, 8, 16, 32, 32, 16

    key = jax.random.PRNGKey(0)
    kx, kp = jax.random.split(key)
    x = jax.random.normal(kx, (B, T, D_in), dtype=jnp.float32)
    params = init_params(kp, D_in, H_S, H_T, D_out)

    fwd = jax.jit(spatial_temporal_nn, static_argnames=("compute_dtype",))
    ref = jax.block_until_ready(reference(x, params))

    # fp32 path: tight tolerance vs. the fp32 reference.
    out_f32 = jax.block_until_ready(fwd(x, params))
    assert out_f32.shape == (B, T, D_out)
    assert jnp.allclose(out_f32, ref, rtol=1e-4, atol=1e-4), "fp32 mismatch vs reference"

    # bf16 storage/compute with f32 accumulation (perf feedback): loose tolerance.
    out_bf16 = jax.block_until_ready(fwd(x, params, compute_dtype=jnp.bfloat16))
    assert out_bf16.shape == (B, T, D_out)
    assert jnp.allclose(out_bf16, ref, rtol=3e-2, atol=3e-2), "bf16 mismatch vs reference"

    print("KERNEL_OK")
</pallas_src>

<mosaic_0001>
module attributes {stable_mosaic.version = 11 : i64} {
  func.func @_rnn_final_kernel(%arg0: i32, %arg1: memref<8x2x128xf32, #tpu.memory_space<vmem>>, %arg2: memref<128x256xf32, #tpu.memory_space<vmem>>, %arg3: memref<1x128xf32, #tpu.memory_space<vmem>>, %arg4: memref<8x2x128xf32, #tpu.memory_space<vmem>>) attributes {dimension_semantics = [#tpu.dimension_semantics<parallel>], iteration_bounds = array<i64: 1>, scalar_prefetch = 0 : i64, scratch_operands = 0 : i64, tpu.core_type = #tpu.core_type<tc>, window_params = [{transform_indices = @transform_0, window_bounds = array<i64: 8, 2, 128>}, {pipeline_mode = #tpu.pipeline_mode<synchronous>, transform_indices = @transform_1, window_bounds = array<i64: 128, 256>}, {pipeline_mode = #tpu.pipeline_mode<synchronous>, transform_indices = @transform_2, window_bounds = array<i64: 1, 128>}, {transform_indices = @transform_3, window_bounds = array<i64: 8, 2, 128>}]} {
    %c0 = arith.constant 0 : index
    %c0_0 = arith.constant 0 : index
    %0 = vector.load %arg2[%c0, %c0_0] : memref<128x256xf32, #tpu.memory_space<vmem>>, vector<128x256xf32>
    %c0_1 = arith.constant 0 : index
    %c0_2 = arith.constant 0 : index
    %1 = vector.load %arg3[%c0_1, %c0_2] : memref<1x128xf32, #tpu.memory_space<vmem>>, vector<1x128xf32>
    %c0_3 = arith.constant 0 : index
    %c0_4 = arith.constant 0 : index
    %c0_5 = arith.constant 0 : index
    %2 = vector.load %arg1[%c0_3, %c0_4, %c0_5] : memref<8x2x128xf32, #tpu.memory_space<vmem>>, vector<1x2x128xf32>
    %3 = vector.shape_cast %2 : vector<1x2x128xf32> to vector<2x128xf32>
    %4 = math.tanh %3 : vector<2x128xf32>
    %c1_i32 = arith.constant 1 : i32
    %cst = arith.constant dense<0.000000e+00> : vector<2x256xf32>
    %5 = tpu.matmul %4, %0, %cst {dimension_numbers = #tpu.dot_dimension_numbers<[1], [0], [0], [1], [0, 0, 1, 1], [], []>} : vector<2x128xf32>, vector<128x256xf32>, vector<2x256xf32> -> vector<2x256xf32>
    %6 = vector.extract_strided_slice %5 {offsets = [0, 128], sizes = [2, 128], strides = [1, 1]} : vector<2x256xf32> to vector<2x128xf32>
    %7 = vector.broadcast %1 : vector<1x128xf32> to vector<2x128xf32>
    %8 = arith.addf %6, %7 : vector<2x128xf32>
    %c1_i32_6 = arith.constant 1 : i32
    %9 = arith.subi %c1_i32, %c1_i32_6 : i32
    %10 = arith.index_cast %9 : i32 to index
    %c0_7 = arith.constant 0 : index
    %c0_8 = arith.constant 0 : index
    %11 = vector.load %arg4[%10, %c0_7, %c0_8] : memref<8x2x128xf32, #tpu.memory_space<vmem>>, vector<1x2x128xf32>
    %12 = vector.shape_cast %11 : vector<1x2x128xf32> to vector<2x128xf32>
    %13 = vector.shape_cast %8 : vector<2x128xf32> to vector<1x2x128xf32>
    tpu.vector_store %arg4[%10, %c0_7, %c0_8], %13 {strides = array<i32>} : memref<8x2x128xf32, #tpu.memory_space<vmem>>, vector<1x2x128xf32>,
    %14 = arith.index_cast %c1_i32 : i32 to index
    %c0_9 = arith.constant 0 : index
    %c0_10 = arith.constant 0 : index
    %15 = vector.load %arg1[%14, %c0_9, %c0_10] : memref<8x2x128xf32, #tpu.memory_space<vmem>>, vector<1x2x128xf32>
    %16 = vector.shape_cast %15 : vector<1x2x128xf32> to vector<2x128xf32>
    %17 = vector.extract_strided_slice %5 {offsets = [0, 0], sizes = [2, 128], strides = [1, 1]} : vector<2x256xf32> to vector<2x128xf32>
    %18 = arith.addf %16, %17 : vector<2x128xf32>
    %19 = math.tanh %18 : vector<2x128xf32>
    %c2_i32 = arith.constant 2 : i32
    %cst_11 = arith.constant dense<0.000000e+00> : vector<2x256xf32>
    %20 = tpu.matmul %19, %0, %cst_11 {dimension_numbers = #tpu.dot_dimension_numbers<[1], [0], [0], [1], [0, 0, 1, 1], [], []>} : vector<2x128xf32>, vector<128x256xf32>, vector<2x256xf32> -> vector<2x256xf32>
    %21 = vector.extract_strided_slice %20 {offsets = [0, 128], sizes = [2, 128], strides = [1, 1]} : vector<2x256xf32> to vector<2x128xf32>
    %22 = vector.broadcast %1 : vector<1x128xf32> to vector<2x128xf32>
    %23 = arith.addf %21, %22 : vector<2x128xf32>
    %c1_i32_12 = arith.constant 1 : i32
    %24 = arith.subi %c2_i32, %c1_i32_12 : i32
    %25 = arith.index_cast %24 : i32 to index
    %c0_13 = arith.constant 0 : index
    %c0_14 = arith.constant 0 : index
    %26 = vector.load %arg4[%25, %c0_13, %c0_14] : memref<8x2x128xf32, #tpu.memory_space<vmem>>, vector<1x2x128xf32>
    %27 = vector.shape_cast %26 : vector<1x2x128xf32> to vector<2x128xf32>
    %28 = vector.shape_cast %23 : vector<2x128xf32> to vector<1x2x128xf32>
    tpu.vector_store %arg4[%25, %c0_13, %c0_14], %28 {strides = array<i32>} : memref<8x2x128xf32, #tpu.memory_space<vmem>>, vector<1x2x128xf32>,
    %29 = arith.index_cast %c2_i32 : i32 to index
    %c0_15 = arith.constant 0 : index
    %c0_16 = arith.constant 0 : index
    %30 = vector.load %arg1[%29, %c0_15, %c0_16] : memref<8x2x128xf32, #tpu.memory_space<vmem>>, vector<1x2x128xf32>
    %31 = vector.shape_cast %30 : vector<1x2x128xf32> to vector<2x128xf32>
    %32 = vector.extract_strided_slice %20 {offsets = [0, 0], sizes = [2, 128], strides = [1, 1]} : vector<2x256xf32> to vector<2x128xf32>
    %33 = arith.addf %31, %32 : vector<2x128xf32>
    %34 = math.tanh %33 : vector<2x128xf32>
    %c3_i32 = arith.constant 3 : i32
    %cst_17 = arith.constant dense<0.000000e+00> : vector<2x256xf32>
    %35 = tpu.matmul %34, %0, %cst_17 {dimension_numbers = #tpu.dot_dimension_numbers<[1], [0], [0], [1], [0, 0, 1, 1], [], []>} : vector<2x128xf32>, vector<128x256xf32>, vector<2x256xf32> -> vector<2x256xf32>
    %36 = vector.extract_strided_slice %35 {offsets = [0, 128], sizes = [2, 128], strides = [1, 1]} : vector<2x256xf32> to vector<2x128xf32>
    %37 = vector.broadcast %1 : vector<1x128xf32> to vector<2x128xf32>
    %38 = arith.addf %36, %37 : vector<2x128xf32>
    %c1_i32_18 = arith.constant 1 : i32
    %39 = arith.subi %c3_i32, %c1_i32_18 : i32
    %40 = arith.index_cast %39 : i32 to index
    %c0_19 = arith.constant 0 : index
    %c0_20 = arith.constant 0 : index
    %41 = vector.load %arg4[%40, %c0_19, %c0_20] : memref<8x2x128xf32, #tpu.memory_space<vmem>>, vector<1x2x128xf32>
    %42 = vector.shape_cast %41 : vector<1x2x128xf32> to vector<2x128xf32>
    %43 = vector.shape_cast %38 : vector<2x128xf32> to vector<1x2x128xf32>
    tpu.vector_store %arg4[%40, %c0_19, %c0_20], %43 {strides = array<i32>} : memref<8x2x128xf32, #tpu.memory_space<vmem>>, vector<1x2x128xf32>,
    %44 = arith.index_cast %c3_i32 : i32 to index
    %c0_21 = arith.constant 0 : index
    %c0_22 = arith.constant 0 : index
    %45 = vector.load %arg1[%44, %c0_21, %c0_22] : memref<8x2x128xf32, #tpu.memory_space<vmem>>, vector<1x2x128xf32>
    %46 = vector.shape_cast %45 : vector<1x2x128xf32> to vector<2x128xf32>
    %47 = vector.extract_strided_slice %35 {offsets = [0, 0], sizes = [2, 128], strides = [1, 1]} : vector<2x256xf32> to vector<2x128xf32>
    %48 = arith.addf %46, %47 : vector<2x128xf32>
    %49 = math.tanh %48 : vector<2x128xf32>
    %c4_i32 = arith.constant 4 : i32
    %cst_23 = arith.constant dense<0.000000e+00> : vector<2x256xf32>
    %50 = tpu.matmul %49, %0, %cst_23 {dimension_numbers = #tpu.dot_dimension_numbers<[1], [0], [0], [1], [0, 0, 1, 1], [], []>} : vector<2x128xf32>, vector<128x256xf32>, vector<2x256xf32> -> vector<2x256xf32>
    %51 = vector.extract_strided_slice %50 {offsets = [0, 128], sizes = [2, 128], strides = [1, 1]} : vector<2x256xf32> to vector<2x128xf32>
    %52 = vector.broadcast %1 : vector<1x128xf32> to vector<2x128xf32>
    %53 = arith.addf %51, %52 : vector<2x128xf32>
    %c1_i32_24 = arith.constant 1 : i32
    %54 = arith.subi %c4_i32, %c1_i32_24 : i32
    %55 = arith.index_cast %54 : i32 to index
    %c0_25 = arith.constant 0 : index
    %c0_26 = arith.constant 0 : index
    %56 = vector.load %arg4[%55, %c0_25, %c0_26] : memref<8x2x128xf32, #tpu.memory_space<vmem>>, vector<1x2x128xf32>
    %57 = vector.shape_cast %56 : vector<1x2x128xf32> to vector<2x128xf32>
    %58 = vector.shape_cast %53 : vector<2x128xf32> to vector<1x2x128xf32>
    tpu.vector_store %arg4[%55, %c0_25, %c0_26], %58 {strides = array<i32>} : memref<8x2x128xf32, #tpu.memory_space<vmem>>, vector<1x2x128xf32>,
    %59 = arith.index_cast %c4_i32 : i32 to index
    %c0_27 = arith.constant 0 : index
    %c0_28 = arith.constant 0 : index
    %60 = vector.load %arg1[%59, %c0_27, %c0_28] : memref<8x2x128xf32, #tpu.memory_space<vmem>>, vector<1x2x128xf32>
    %61 = vector.shape_cast %60 : vector<1x2x128xf32> to vector<2x128xf32>
    %62 = vector.extract_strided_slice %50 {offsets = [0, 0], sizes = [2, 128], strides = [1, 1]} : vector<2x256xf32> to vector<2x128xf32>
    %63 = arith.addf %61, %62 : vector<2x128xf32>
    %64 = math.tanh %63 : vector<2x128xf32>
    %c5_i32 = arith.constant 5 : i32
    %cst_29 = arith.constant dense<0.000000e+00> : vector<2x256xf32>
    %65 = tpu.matmul %64, %0, %cst_29 {dimension_numbers = #tpu.dot_dimension_numbers<[1], [0], [0], [1], [0, 0, 1, 1], [], []>} : vector<2x128xf32>, vector<128x256xf32>, vector<2x256xf32> -> vector<2x256xf32>
    %66 = vector.extract_strided_slice %65 {offsets = [0, 128], sizes = [2, 128], strides = [1, 1]} : vector<2x256xf32> to vector<2x128xf32>
    %67 = vector.broadcast %1 : vector<1x128xf32> to vector<2x128xf32>
    %68 = arith.addf %66, %67 : vector<2x128xf32>
    %c1_i32_30 = arith.constant 1 : i32
    %69 = arith.subi %c5_i32, %c1_i32_30 : i32
    %70 = arith.index_cast %69 : i32 to index
    %c0_31 = arith.constant 0 : index
    %c0_32 = arith.constant 0 : index
    %71 = vector.load %arg4[%70, %c0_31, %c0_32] : memref<8x2x128xf32, #tpu.memory_space<vmem>>, vector<1x2x128xf32>
    %72 = vector.shape_cast %71 : vector<1x2x128xf32> to vector<2x128xf32>
    %73 = vector.shape_cast %68 : vector<2x128xf32> to vector<1x2x128xf32>
    tpu.vector_store %arg4[%70, %c0_31, %c0_32], %73 {strides = array<i32>} : memref<8x2x128xf32, #tpu.memory_space<vmem>>, vector<1x2x128xf32>,
    %74 = arith.index_cast %c5_i32 : i32 to index
    %c0_33 = arith.constant 0 : index
    %c0_34 = arith.constant 0 : index
    %75 = vector.load %arg1[%74, %c0_33, %c0_34] : memref<8x2x128xf32, #tpu.memory_space<vmem>>, vector<1x2x128xf32>
    %76 = vector.shape_cast %75 : vector<1x2x128xf32> to vector<2x128xf32>
    %77 = vector.extract_strided_slice %65 {offsets = [0, 0], sizes = [2, 128], strides = [1, 1]} : vector<2x256xf32> to vector<2x128xf32>
    %78 = arith.addf %76, %77 : vector<2x128xf32>
    %79 = math.tanh %78 : vector<2x128xf32>
    %c6_i32 = arith.constant 6 : i32
    %cst_35 = arith.constant dense<0.000000e+00> : vector<2x256xf32>
    %80 = tpu.matmul %79, %0, %cst_35 {dimension_numbers = #tpu.dot_dimension_numbers<[1], [0], [0], [1], [0, 0, 1, 1], [], []>} : vector<2x128xf32>, vector<128x256xf32>, vector<2x256xf32> -> vector<2x256xf32>
    %81 = vector.extract_strided_slice %80 {offsets = [0, 128], sizes = [2, 128], strides = [1, 1]} : vector<2x256xf32> to vector<2x128xf32>
    %82 = vector.broadcast %1 : vector<1x128xf32> to vector<2x128xf32>
    %83 = arith.addf %81, %82 : vector<2x128xf32>
    %c1_i32_36 = arith.constant 1 : i32
    %84 = arith.subi %c6_i32, %c1_i32_36 : i32
    %85 = arith.index_cast %84 : i32 to index
    %c0_37 = arith.constant 0 : index
    %c0_38 = arith.constant 0 : index
    %86 = vector.load %arg4[%85, %c0_37, %c0_38] : memref<8x2x128xf32, #tpu.memory_space<vmem>>, vector<1x2x128xf32>
    %87 = vector.shape_cast %86 : vector<1x2x128xf32> to vector<2x128xf32>
    %88 = vector.shape_cast %83 : vector<2x128xf32> to vector<1x2x128xf32>
    tpu.vector_store %arg4[%85, %c0_37, %c0_38], %88 {strides = array<i32>} : memref<8x2x128xf32, #tpu.memory_space<vmem>>, vector<1x2x128xf32>,
    %89 = arith.index_cast %c6_i32 : i32 to index
    %c0_39 = arith.constant 0 : index
    %c0_40 = arith.constant 0 : index
    %90 = vector.load %arg1[%89, %c0_39, %c0_40] : memref<8x2x128xf32, #tpu.memory_space<vmem>>, vector<1x2x128xf32>
    %91 = vector.shape_cast %90 : vector<1x2x128xf32> to vector<2x128xf32>
    %92 = vector.extract_strided_slice %80 {offsets = [0, 0], sizes = [2, 128], strides = [1, 1]} : vector<2x256xf32> to vector<2x128xf32>
    %93 = arith.addf %91, %92 : vector<2x128xf32>
    %94 = math.tanh %93 : vector<2x128xf32>
    %c7_i32 = arith.constant 7 : i32
    %cst_41 = arith.constant dense<0.000000e+00> : vector<2x256xf32>
    %95 = tpu.matmul %94, %0, %cst_41 {dimension_numbers = #tpu.dot_dimension_numbers<[1], [0], [0], [1], [0, 0, 1, 1], [], []>} : vector<2x128xf32>, vector<128x256xf32>, vector<2x256xf32> -> vector<2x256xf32>
    %96 = vector.extract_strided_slice %95 {offsets = [0, 128], sizes = [2, 128], strides = [1, 1]} : vector<2x256xf32> to vector<2x128xf32>
    %97 = vector.broadcast %1 : vector<1x128xf32> to vector<2x128xf32>
    %98 = arith.addf %96, %97 : vector<2x128xf32>
    %c1_i32_42 = arith.constant 1 : i32
    %99 = arith.subi %c7_i32, %c1_i32_42 : i32
    %100 = arith.index_cast %99 : i32 to index
    %c0_43 = arith.constant 0 : index
    %c0_44 = arith.constant 0 : index
    %101 = vector.load %arg4[%100, %c0_43, %c0_44] : memref<8x2x128xf32, #tpu.memory_space<vmem>>, vector<1x2x128xf32>
    %102 = vector.shape_cast %101 : vector<1x2x128xf32> to vector<2x128xf32>
    %103 = vector.shape_cast %98 : vector<2x128xf32> to vector<1x2x128xf32>
    tpu.vector_store %arg4[%100, %c0_43, %c0_44], %103 {strides = array<i32>} : memref<8x2x128xf32, #tpu.memory_space<vmem>>, vector<1x2x128xf32>,
    %104 = arith.index_cast %c7_i32 : i32 to index
    %c0_45 = arith.constant 0 : index
    %c0_46 = arith.constant 0 : index
    %105 = vector.load %arg1[%104, %c0_45, %c0_46] : memref<8x2x128xf32, #tpu.memory_space<vmem>>, vector<1x2x128xf32>
    %106 = vector.shape_cast %105 : vector<1x2x128xf32> to vector<2x128xf32>
    %107 = vector.extract_strided_slice %95 {offsets = [0, 0], sizes = [2, 128], strides = [1, 1]} : vector<2x256xf32> to vector<2x128xf32>
    %108 = arith.addf %106, %107 : vector<2x128xf32>
    %109 = math.tanh %108 : vector<2x128xf32>
    %c7_i32_47 = arith.constant 7 : i32
    %110 = vector.extract_strided_slice %0 {offsets = [0, 128], sizes = [128, 128], strides = [1, 1]} : vector<128x256xf32> to vector<128x128xf32>
    %cst_48 = arith.constant dense<0.000000e+00> : vector<2x128xf32>
    %111 = tpu.matmul %109, %110, %cst_48 {dimension_numbers = #tpu.dot_dimension_numbers<[1], [0], [0], [1], [0, 0, 1, 1], [], []>} : vector<2x128xf32>, vector<128x128xf32>, vector<2x128xf32> -> vector<2x128xf32>
    %112 = vector.broadcast %1 : vector<1x128xf32> to vector<2x128xf32>
    %113 = arith.addf %111, %112 : vector<2x128xf32>
    %c7 = arith.constant 7 : index
    %c0_49 = arith.constant 0 : index
    %c0_50 = arith.constant 0 : index
    %114 = vector.load %arg4[%c7, %c0_49, %c0_50] : memref<8x2x128xf32, #tpu.memory_space<vmem>>, vector<1x2x128xf32>
    %115 = vector.shape_cast %114 : vector<1x2x128xf32> to vector<2x128xf32>
    %116 = vector.shape_cast %113 : vector<2x128xf32> to vector<1x2x128xf32>
    tpu.vector_store %arg4[%c7, %c0_49, %c0_50], %116 {strides = array<i32>} : memref<8x2x128xf32, #tpu.memory_space<vmem>>, vector<1x2x128xf32>,
    return
  }
  func.func @transform_0(%arg0: i32) -> (i32, i32, i32) {
    %c0_i32 = arith.constant 0 : i32
    %c0_i32_0 = arith.constant 0 : i32
    %c0_i32_1 = arith.constant 0 : i32
    return %c0_i32, %arg0, %c0_i32_0 : i32, i32, i32
  }
  func.func @transform_1(%arg0: i32) -> (i32, i32) {
    %c0_i32 = arith.constant 0 : i32
    %c0_i32_0 = arith.constant 0 : i32
    %c0_i32_1 = arith.constant 0 : i32
    return %c0_i32, %c0_i32_0 : i32, i32
  }
  func.func @transform_2(%arg0: i32) -> (i32, i32) {
    %c0_i32 = arith.constant 0 : i32
    %c0_i32_0 = arith.constant 0 : i32
    %c0_i32_1 = arith.constant 0 : i32
    return %c0_i32, %c0_i32_0 : i32, i32
  }
  func.func @transform_3(%arg0: i32) -> (i32, i32, i32) {
    %c0_i32 = arith.constant 0 : i32
    %c0_i32_0 = arith.constant 0 : i32
    %c0_i32_1 = arith.constant 0 : i32
    return %c0_i32, %arg0, %c0_i32_0 : i32, i32, i32
  }
}

module attributes {stable_mosaic.version = 11 : i64} {
  func.func @_proj_kernel(%arg0: i32, %arg1: memref<16x16xf32, #tpu.memory_space<vmem>>, %arg2: memref<16x128xf32, #tpu.memory_space<vmem>>, %arg3: memref<1x128xf32, #tpu.memory_space<vmem>>, %arg4: memref<128x128xf32, #tpu.memory_space<vmem>>, %arg5: memref<1x128xf32, #tpu.memory_space<vmem>>, %arg6: memref<16x128xf32, #tpu.memory_space<vmem>>) attributes {dimension_semantics = [#tpu.dimension_semantics<parallel>], iteration_bounds = array<i64: 1>, scalar_prefetch = 0 : i64, scratch_operands = 0 : i64, tpu.core_type = #tpu.core_type<tc>, window_params = [{transform_indices = @transform_0, window_bounds = array<i64: 16, 16>}, {pipeline_mode = #tpu.pipeline_mode<synchronous>, transform_indices = @transform_1, window_bounds = array<i64: 16, 128>}, {pipeline_mode = #tpu.pipeline_mode<synchronous>, transform_indices = @transform_2, window_bounds = array<i64: 1, 128>}, {pipeline_mode = #tpu.pipeline_mode<synchronous>, transform_indices = @transform_3, window_bounds = array<i64: 128, 128>}, {pipeline_mode = #tpu.pipeline_mode<synchronous>, transform_indices = @transform_4, window_bounds = array<i64: 1, 128>}, {transform_indices = @transform_5, window_bounds = array<i64: 16, 128>}]} {
    %c0 = arith.constant 0 : index
    %c0_0 = arith.constant 0 : index
    %0 = vector.load %arg1[%c0, %c0_0] : memref<16x16xf32, #tpu.memory_space<vmem>>, vector<16x16xf32>
    %c0_1 = arith.constant 0 : index
    %c0_2 = arith.constant 0 : index
    %1 = vector.load %arg2[%c0_1, %c0_2] : memref<16x128xf32, #tpu.memory_space<vmem>>, vector<16x128xf32>
    %cst = arith.constant dense<0.000000e+00> : vector<16x128xf32>
    %2 = tpu.matmul %0, %1, %cst {dimension_numbers = #tpu.dot_dimension_numbers<[1], [0], [0], [1], [0, 0, 1, 1], [], []>} : vector<16x16xf32>, vector<16x128xf32>, vector<16x128xf32> -> vector<16x128xf32>
    %c0_3 = arith.constant 0 : index
    %c0_4 = arith.constant 0 : index
    %3 = vector.load %arg3[%c0_3, %c0_4] : memref<1x128xf32, #tpu.memory_space<vmem>>, vector<1x128xf32>
    %4 = vector.broadcast %3 : vector<1x128xf32> to vector<16x128xf32>
    %5 = arith.addf %2, %4 : vector<16x128xf32>
    %cst_5 = arith.constant 0.000000e+00 : f32
    %6 = vector.broadcast %cst_5 : f32 to vector<16x128xf32>
    %7 = arith.maximumf %5, %6 : vector<16x128xf32>
    %c0_6 = arith.constant 0 : index
    %c0_7 = arith.constant 0 : index
    %8 = vector.load %arg4[%c0_6, %c0_7] : memref<128x128xf32, #tpu.memory_space<vmem>>, vector<128x128xf32>
    %cst_8 = arith.constant dense<0.000000e+00> : vector<16x128xf32>
    %9 = tpu.matmul %7, %8, %cst_8 {dimension_numbers = #tpu.dot_dimension_numbers<[1], [0], [0], [1], [0, 0, 1, 1], [], []>} : vector<16x128xf32>, vector<128x128xf32>, vector<16x128xf32> -> vector<16x128xf32>
    %c0_9 = arith.constant 0 : index
    %c0_10 = arith.constant 0 : index
    %10 = vector.load %arg5[%c0_9, %c0_10] : memref<1x128xf32, #tpu.memory_space<vmem>>, vector<1x128xf32>
    %11 = vector.broadcast %10 : vector<1x128xf32> to vector<16x128xf32>
    %12 = arith.addf %9, %11 : vector<16x128xf32>
    %c0_11 = arith.constant 0 : index
    %c0_12 = arith.constant 0 : index
    %13 = vector.load %arg6[%c0_11, %c0_12] : memref<16x128xf32, #tpu.memory_space<vmem>>, vector<16x128xf32>
    tpu.vector_store %arg6[%c0_11, %c0_12], %12 {strides = array<i32>} : memref<16x128xf32, #tpu.memory_space<vmem>>, vector<16x128xf32>,
    return
  }
  func.func @transform_0(%arg0: i32) -> (i32, i32) {
    %c0_i32 = arith.constant 0 : i32
    %c0_i32_0 = arith.constant 0 : i32
    return %arg0, %c0_i32 : i32, i32
  }
  func.func @transform_1(%arg0: i32) -> (i32, i32) {
    %c0_i32 = arith.constant 0 : i32
    %c0_i32_0 = arith.constant 0 : i32
    %c0_i32_1 = arith.constant 0 : i32
    return %c0_i32, %c0_i32_0 : i32, i32
  }
  func.func @transform_2(%arg0: i32) -> (i32, i32) {
    %c0_i32 = arith.constant 0 : i32
    %c0_i32_0 = arith.constant 0 : i32
    %c0_i32_1 = arith.constant 0 : i32
    return %c0_i32, %c0_i32_0 : i32, i32
  }
  func.func @transform_3(%arg0: i32) -> (i32, i32) {
    %c0_i32 = arith.constant 0 : i32
    %c0_i32_0 = arith.constant 0 : i32
    %c0_i32_1 = arith.constant 0 : i32
    return %c0_i32, %c0_i32_0 : i32, i32
  }
  func.func @transform_4(%arg0: i32) -> (i32, i32) {
    %c0_i32 = arith.constant 0 : i32
    %c0_i32_0 = arith.constant 0 : i32
    %c0_i32_1 = arith.constant 0 : i32
    return %c0_i32, %c0_i32_0 : i32, i32
  }
  func.func @transform_5(%arg0: i32) -> (i32, i32) {
    %c0_i32 = arith.constant 0 : i32
    %c0_i32_0 = arith.constant 0 : i32
    return %arg0, %c0_i32 : i32, i32
  }
}

</mosaic_0001>

<llo_original>
// kernel: spatial_temporal_nn.2
$region0: #{spatial_temporal_nn.2}
  #allocation0 [shape = 'u32[]', space=smem, size = 0x4, offset = 0x4, fixed_abs, tag = 'smem constant byte address 0x4 - core index']
  #allocation1 [shape = 'u32[144,128]{1,0:T(1,128)}', space=vmem, size = 0x12000, scoped, tag = 'internal scratch']
  %s0 = inlined_call_operand.vmem [shape: f32[16,16], index: 0, kind: input, shape index: {}]
  %s1 = inlined_call_operand.vmem [shape: f32[16,128], index: 1, kind: input, shape index: {}]
  %s2 = inlined_call_operand.vmem [shape: f32[1,128], index: 2, kind: input, shape index: {}]
  %s3 = inlined_call_operand.vmem [shape: f32[128,128], index: 3, kind: input, shape index: {}]
  %s4 = inlined_call_operand.vmem [shape: f32[1,128], index: 4, kind: input, shape index: {}]
  %s5 = inlined_call_operand.vmem [shape: f32[16,128], index: 5, kind: output, shape index: {}]
  %s6 = sld [smem:[#allocation0]]
  $region30: #{spatial_temporal_nn.2} parent=0
    _
  %s8 = ssub.s32 1, %s6
  %s9 = scalar_select 0, %s8, %s6
  // Predicated region
  $region2: #{spatial_temporal_nn.2} parent=0 // pred_check
    _
  $region3: #{spatial_temporal_nn.2} parent=0 // pred_check_branch
    %11 = sbr.rel (0) target = $region5
  $region4: #{spatial_temporal_nn.2} parent=0 // pred_region
    _
  $region5: #{spatial_temporal_nn.2} parent=0 // pred_fallthru
    _
  // Predicated region
  $region6: #{spatial_temporal_nn.2} parent=0 // pred_check
    _
  $region7: #{spatial_temporal_nn.2} parent=0 // pred_check_branch
    %13 = sbr.rel (0) target = $region9
  $region8: #{spatial_temporal_nn.2} parent=0 // pred_region
    _
  $region9: #{spatial_temporal_nn.2} parent=0 // pred_fallthru
    _
  // Predicated region
  $region10: #{spatial_temporal_nn.2} parent=0 // pred_check
    _
  $region11: #{spatial_temporal_nn.2} parent=0 // pred_check_branch
    %15 = sbr.rel (0) target = $region13
  $region12: #{spatial_temporal_nn.2} parent=0 // pred_region
    _
  $region13: #{spatial_temporal_nn.2} parent=0 // pred_fallthru
    _
  // Predicated region
  $region14: #{spatial_temporal_nn.2} parent=0 // pred_check
    _
  $region15: #{spatial_temporal_nn.2} parent=0 // pred_check_branch
    %17 = sbr.rel (0) target = $region17
  $region16: #{spatial_temporal_nn.2} parent=0 // pred_region
    _
  $region17: #{spatial_temporal_nn.2} parent=0 // pred_fallthru
    _
  // Predicated region
  $region18: #{spatial_temporal_nn.2} parent=0 // pred_check
    _
  $region19: #{spatial_temporal_nn.2} parent=0 // pred_check_branch
    %19 = sbr.rel (0) target = $region21
  $region20: #{spatial_temporal_nn.2} parent=0 // pred_region
    _
  $region21: #{spatial_temporal_nn.2} parent=0 // pred_fallthru
    _
  %v20 = vld [vmem:[%s0] sm:$0xff]
  %v21 = vld [vmem:[%s0 + $0x8] sm:$0xff]
  %v22 = vld [vmem:[%s1] sm:$0xff]
  %v23 = vld [vmem:[%s1 + $0x8] sm:$0xff]
  %v24 = vld [vmem:[%s2] sm:$0x1]
  %v26 = vlaneseq
  %v27 = vshrl.u32 %v26, 7
  %v28 = vsub.s32 0, %v27
  %v29 = vrot.slane %v24, %v28
  %vm31 = vcmask 130048
  %v33 = vsel %vm31, %v20, 0
  %v36 = vsel %vm31, %v21, 0
  %38 = vmatprep.subr.mxu0 0.0
  %39 = vmatpush1.msra.mxu0 %v22
  %40 = vmatprep.subr.mxu0 0.0
  %41 = vmatpush1.msra.mxu0 %v23
  %42 = vmatprep.subr.mxu0 0.0
  %43 = vmatpush1.msra.mxu0 0.0
  %44 = vmatprep.subr.mxu0 0.0
  %45 = vmatpush1.msra.mxu0 0.0
  %46 = vmatprep.subr.mxu0 0.0
  %47 = vmatpush1.msra.mxu0 0.0
  %48 = vmatprep.subr.mxu0 0.0
  %49 = vmatpush1.msra.mxu0 0.0
  %50 = vmatprep.subr.mxu0 0.0
  %51 = vmatpush1.msra.mxu0 0.0
  %52 = vmatprep.subr.mxu0 0.0
  %53 = vmatpush1.msra.mxu0 0.0
  %54 = vmatprep.subr.mxu0 0.0
  %55 = vmatpush1.msra.mxu0 0.0
  %56 = vmatprep.subr.mxu0 0.0
  %57 = vmatpush1.msra.mxu0 0.0
  %58 = vmatprep.subr.mxu0 0.0
  %59 = vmatpush1.msra.mxu0 0.0
  %60 = vmatprep.subr.mxu0 0.0
  %61 = vmatpush1.msra.mxu0 0.0
  %62 = vmatprep.subr.mxu0 0.0
  %63 = vmatpush1.msra.mxu0 0.0
  %64 = vmatprep.subr.mxu0 0.0
  %65 = vmatpush1.msra.mxu0 0.0
  %66 = vmatprep.subr.mxu0 0.0
  %67 = vmatpush1.msra.mxu0 0.0
  %68 = vmatprep.subr.mxu0 0.0
  %69 = vmatpush1.msra.mxu0 0.0
  %70 = vmatprep.subr.mxu0 0.0
  %71 = vmatpush1.msra.mxu0 0.0
  %72 = vmatprep.subr.mxu0 0.0
  %73 = vmatpush1.msra.mxu0 0.0
  %74 = vmatprep.subr.mxu0 0.0
  %75 = vmatpush1.msra.mxu0 0.0
  %76 = vmatprep.subr.mxu0 0.0
  %77 = vmatpush1.msra.mxu0 0.0
  %78 = vmatprep.subr.mxu0 0.0
  %79 = vmatpush1.msra.mxu0 0.0
  %80 = vmatprep.subr.mxu0 0.0
  %81 = vmatpush1.msra.mxu0 0.0
  %82 = vmatprep.subr.mxu0 0.0
  %83 = vmatpush1.msra.mxu0 0.0
  %84 = vmatprep.subr.mxu0 0.0
  %85 = vmatpush1.msra.mxu0 0.0
  %86 = vmatprep.subr.mxu0 0.0
  %87 = vmatpush1.msra.mxu0 0.0
  %88 = vmatprep.subr.mxu0 0.0
  %89 = vmatpush1.msra.mxu0 0.0
  %90 = vmatprep.subr.mxu0 0.0
  %91 = vmatpush1.msra.mxu0 0.0
  %92 = vmatprep.subr.mxu0 0.0
  %93 = vmatpush1.msra.mxu0 0.0
  %94 = vmatprep.subr.mxu0 0.0
  %95 = vmatpush1.msra.mxu0 0.0
  %96 = vmatprep.subr.mxu0 0.0
  %97 = vmatpush1.msra.mxu0 0.0
  %98 = vmatprep.subr.mxu0 0.0
  %99 = vmatpush1.msra.mxu0 0.0
  %100 = vmatprep.subr.mxu0 0.0
  %101 = vmatpush1.msra.mxu0 0.0
  %102 = vmatprep.mubr.f32.mxu0 0.0
  %103 = vmatmul.mubr.f32.gmra.mrb[0].mxu0 %v33
  %v104 = vpop.f32.mrb[0].mxu0
  %v105 = vadd.f32 %v29, %v104
  %v106 = vpop.f32.mrb[0].mxu0
  %107 = vmatprep.mubr.f32.mxu0 0.0
  %108 = vmatmul.mubr.f32.gmra.mrb[0].mxu0 %v36
  %v109 = vpop.f32.mrb[0].mxu0
  %v110 = vadd.f32 %v29, %v109
  %v111 = vpop.f32.mrb[0].mxu0
  %112 = vdwg.mxu0
  %v113 = vmax.f32 %v105, 0.0
  %v114 = vmax.f32 %v110, 0.0
  %v115 = vld [vmem:[%s3] sm:$0xff]
  %v116 = vld [vmem:[%s3 + $0x8] sm:$0xff]
  %v117 = vld [vmem:[%s3 + $0x10] sm:$0xff]
  %v118 = vld [vmem:[%s3 + $0x18] sm:$0xff]
  %v119 = vld [vmem:[%s3 + $0x20] sm:$0xff]
  %v120 = vld [vmem:[%s3 + $0x28] sm:$0xff]
  %v121 = vld [vmem:[%s3 + $0x30] sm:$0xff]
  %v122 = vld [vmem:[%s3 + $0x38] sm:$0xff]
  %v123 = vld [vmem:[%s3 + $0x40] sm:$0xff]
  %v124 = vld [vmem:[%s3 + $0x48] sm:$0xff]
  %v125 = vld [vmem:[%s3 + $0x50] sm:$0xff]
  %v126 = vld [vmem:[%s3 + $0x58] sm:$0xff]
  %v127 = vld [vmem:[%s3 + $0x60] sm:$0xff]
  %v128 = vld [vmem:[%s3 + $0x68] sm:$0xff]
  %v129 = vld [vmem:[%s3 + $0x70] sm:$0xff]
  %v130 = vld [vmem:[%s3 + $0x78] sm:$0xff]
  %v131 = vld [vmem:[%s4] sm:$0x1]
  %v133 = vlaneseq
  %v134 = vshrl.u32 %v133, 7
  %v135 = vsub.s32 0, %v134
  %v136 = vrot.slane %v131, %v135
  %138 = vmatprep.subr.mxu0 0.0
  %139 = vmatpush1.msra.mxu0 %v115
  %140 = vmatprep.subr.mxu0 0.0
  %141 = vmatpush1.msra.mxu0 %v116
  %142 = vmatprep.subr.mxu0 0.0
  %143 = vmatpush1.msra.mxu0 %v117
  %144 = vmatprep.subr.mxu0 0.0
  %145 = vmatpush1.msra.mxu0 %v118
  %146 = vmatprep.subr.mxu0 0.0
  %147 = vmatpush1.msra.mxu0 %v119
  %148 = vmatprep.subr.mxu0 0.0
  %149 = vmatpush1.msra.mxu0 %v120
  %150 = vmatprep.subr.mxu0 0.0
  %151 = vmatpush1.msra.mxu0 %v121
  %152 = vmatprep.subr.mxu0 0.0
  %153 = vmatpush1.msra.mxu0 %v122
  %154 = vmatprep.subr.mxu0 0.0
  %155 = vmatpush1.msra.mxu0 %v123
  %156 = vmatprep.subr.mxu0 0.0
  %157 = vmatpush1.msra.mxu0 %v124
  %158 = vmatprep.subr.mxu0 0.0
  %159 = vmatpush1.msra.mxu0 %v125
  %160 = vmatprep.subr.mxu0 0.0
  %161 = vmatpush1.msra.mxu0 %v126
  %162 = vmatprep.subr.mxu0 0.0
  %163 = vmatpush1.msra.mxu0 %v127
  %164 = vmatprep.subr.mxu0 0.0
  %165 = vmatpush1.msra.mxu0 %v128
  %166 = vmatprep.subr.mxu0 0.0
  %167 = vmatpush1.msra.mxu0 %v129
  %168 = vmatprep.subr.mxu0 0.0
  %169 = vmatpush1.msra.mxu0 %v130
  %170 = vmatprep.subr.mxu0 0.0
  %171 = vmatpush1.msra.mxu0 0.0
  %172 = vmatprep.subr.mxu0 0.0
  %173 = vmatpush1.msra.mxu0 0.0
  %174 = vmatprep.subr.mxu0 0.0
  %175 = vmatpush1.msra.mxu0 0.0
  %176 = vmatprep.subr.mxu0 0.0
  %177 = vmatpush1.msra.mxu0 0.0
  %178 = vmatprep.subr.mxu0 0.0
  %179 = vmatpush1.msra.mxu0 0.0
  %180 = vmatprep.subr.mxu0 0.0
  %181 = vmatpush1.msra.mxu0 0.0
  %182 = vmatprep.subr.mxu0 0.0
  %183 = vmatpush1.msra.mxu0 0.0
  %184 = vmatprep.subr.mxu0 0.0
  %185 = vmatpush1.msra.mxu0 0.0
  %186 = vmatprep.subr.mxu0 0.0
  %187 = vmatpush1.msra.mxu0 0.0
  %188 = vmatprep.subr.mxu0 0.0
  %189 = vmatpush1.msra.mxu0 0.0
  %190 = vmatprep.subr.mxu0 0.0
  %191 = vmatpush1.msra.mxu0 0.0
  %192 = vmatprep.subr.mxu0 0.0
  %193 = vmatpush1.msra.mxu0 0.0
  %194 = vmatprep.subr.mxu0 0.0
  %195 = vmatpush1.msra.mxu0 0.0
  %196 = vmatprep.subr.mxu0 0.0
  %197 = vmatpush1.msra.mxu0 0.0
  %198 = vmatprep.subr.mxu0 0.0
  %199 = vmatpush1.msra.mxu0 0.0
  %200 = vmatprep.subr.mxu0 0.0
  %201 = vmatpush1.msra.mxu0 0.0
  %202 = vmatprep.mubr.f32.mxu0 0.0
  %203 = vmatmul.mubr.f32.gmra.mrb[0].mxu0 %v113
  %v204 = vpop.f32.mrb[0].mxu0
  %v205 = vadd.f32 %v136, %v204
  %v206 = vpop.f32.mrb[0].mxu0
  %207 = vmatprep.mubr.f32.mxu0 0.0
  %208 = vmatmul.mubr.f32.gmra.mrb[0].mxu0 %v114
  %v209 = vpop.f32.mrb[0].mxu0
  %v210 = vadd.f32 %v136, %v209
  %v211 = vpop.f32.mrb[0].mxu0
  %212 = vdwg.mxu0
  %213 = vst [vmem:[%s5] sm:$0xff] %v205
  %214 = vst [vmem:[%s5 + $0x8] sm:$0xff] %v210
  // Predicated region
  $region22: #{spatial_temporal_nn.2} parent=0 // pred_check
    _
  $region23: #{spatial_temporal_nn.2} parent=0 // pred_check_branch
    %216 = sbr.rel (0) target = $region25
  $region24: #{spatial_temporal_nn.2} parent=0 // pred_region
    _
  $region25: #{spatial_temporal_nn.2} parent=0 // pred_fallthru
    _
  // Predicated region
  $region26: #{spatial_temporal_nn.2} parent=0 // pred_check
    _
  $region27: #{spatial_temporal_nn.2} parent=0 // pred_check_branch
    %218 = sbr.rel (0) target = $region29
  $region28: #{spatial_temporal_nn.2} parent=0 // pred_region
    _
  $region29: #{spatial_temporal_nn.2} parent=0 // pred_fallthru
    _

// kernel: spatial_temporal_nn.3
$region0: #{spatial_temporal_nn.3}
  #allocation0 [shape = 'u32[]', space=smem, size = 0x4, offset = 0x4, fixed_abs, tag = 'smem constant byte address 0x4 - core index']
  #allocation1 [shape = 'u32[144,128]{1,0:T(1,128)}', space=vmem, size = 0x12000, scoped, tag = 'internal scratch']
  %s0 = inlined_call_operand.vmem [shape: f32[8,2,128], index: 0, kind: input, shape index: {}]
  %s1 = inlined_call_operand.vmem [shape: f32[128,256], index: 1, kind: input, shape index: {}]
  %s2 = inlined_call_operand.vmem [shape: f32[1,128], index: 2, kind: input, shape index: {}]
  %s3 = inlined_call_operand.vmem [shape: f32[8,2,128], index: 3, kind: output, shape index: {}]
  %s4 = sld [smem:[#allocation0]]
  $region22: #{spatial_temporal_nn.3} parent=0
    _
  %s6 = ssub.s32 1, %s4
  %s7 = scalar_select 0, %s6, %s4
  // Predicated region
  $region2: #{spatial_temporal_nn.3} parent=0 // pred_check
    _
  $region3: #{spatial_temporal_nn.3} parent=0 // pred_check_branch
    %9 = sbr.rel (0) target = $region5
  $region4: #{spatial_temporal_nn.3} parent=0 // pred_region
    _
  $region5: #{spatial_temporal_nn.3} parent=0 // pred_fallthru
    _
  // Predicated region
  $region6: #{spatial_temporal_nn.3} parent=0 // pred_check
    _
  $region7: #{spatial_temporal_nn.3} parent=0 // pred_check_branch
    %11 = sbr.rel (0) target = $region9
  $region8: #{spatial_temporal_nn.3} parent=0 // pred_region
    _
  $region9: #{spatial_temporal_nn.3} parent=0 // pred_fallthru
    _
  // Predicated region
  $region10: #{spatial_temporal_nn.3} parent=0 // pred_check
    _
  $region11: #{spatial_temporal_nn.3} parent=0 // pred_check_branch
    %13 = sbr.rel (0) target = $region13
  $region12: #{spatial_temporal_nn.3} parent=0 // pred_region
    _
  $region13: #{spatial_temporal_nn.3} parent=0 // pred_fallthru
    _
  %v14 = vld [vmem:[%s1] sm:$0xff]
  %v15 = vld [vmem:[%s1 + $0x8] sm:$0xff]
  %v16 = vld [vmem:[%s1 + $0x10] sm:$0xff]
  %v17 = vld [vmem:[%s1 + $0x18] sm:$0xff]
  %v18 = vld [vmem:[%s1 + $0x20] sm:$0xff]
  %v19 = vld [vmem:[%s1 + $0x28] sm:$0xff]
  %v20 = vld [vmem:[%s1 + $0x30] sm:$0xff]
  %v21 = vld [vmem:[%s1 + $0x38] sm:$0xff]
  %v22 = vld [vmem:[%s1 + $0x40] sm:$0xff]
  %v23 = vld [vmem:[%s1 + $0x48] sm:$0xff]
  %v24 = vld [vmem:[%s1 + $0x50] sm:$0xff]
  %v25 = vld [vmem:[%s1 + $0x58] sm:$0xff]
  %v26 = vld [vmem:[%s1 + $0x60] sm:$0xff]
  %v27 = vld [vmem:[%s1 + $0x68] sm:$0xff]
  %v28 = vld [vmem:[%s1 + $0x70] sm:$0xff]
  %v29 = vld [vmem:[%s1 + $0x78] sm:$0xff]
  %v30 = vld [vmem:[%s1 + $0x80] sm:$0xff]
  %v31 = vld [vmem:[%s1 + $0x88] sm:$0xff]
  %v32 = vld [vmem:[%s1 + $0x90] sm:$0xff]
  %v33 = vld [vmem:[%s1 + $0x98] sm:$0xff]
  %v34 = vld [vmem:[%s1 + $0xa0] sm:$0xff]
  %v35 = vld [vmem:[%s1 + $0xa8] sm:$0xff]
  %v36 = vld [vmem:[%s1 + $0xb0] sm:$0xff]
  %v37 = vld [vmem:[%s1 + $0xb8] sm:$0xff]
  %v38 = vld [vmem:[%s1 + $0xc0] sm:$0xff]
  %v39 = vld [vmem:[%s1 + $0xc8] sm:$0xff]
  %v40 = vld [vmem:[%s1 + $0xd0] sm:$0xff]
  %v41 = vld [vmem:[%s1 + $0xd8] sm:$0xff]
  %v42 = vld [vmem:[%s1 + $0xe0] sm:$0xff]
  %v43 = vld [vmem:[%s1 + $0xe8] sm:$0xff]
  %v44 = vld [vmem:[%s1 + $0xf0] sm:$0xff]
  %v45 = vld [vmem:[%s1 + $0xf8] sm:$0xff]
  %v46 = vld [vmem:[%s2] sm:$0x1]
  %v47 = vld [vmem:[%s0] sm:$0x3]
  %v48 = vtanh.pop %v47
  %49 = vmatprep.subr.mxu0 %v15
  %50 = vmatpush1.msra.mxu0 %v14
  %51 = vmatprep.subr.mxu0 %v17
  %52 = vmatpush1.msra.mxu0 %v16
  %53 = vmatprep.subr.mxu0 %v19
  %54 = vmatpush1.msra.mxu0 %v18
  %55 = vmatprep.subr.mxu0 %v21
  %56 = vmatpush1.msra.mxu0 %v20
  %57 = vmatprep.subr.mxu0 %v23
  %58 = vmatpush1.msra.mxu0 %v22
  %59 = vmatprep.subr.mxu0 %v25
  %60 = vmatpush1.msra.mxu0 %v24
  %61 = vmatprep.subr.mxu0 %v27
  %62 = vmatpush1.msra.mxu0 %v26
  %63 = vmatprep.subr.mxu0 %v29
  %64 = vmatpush1.msra.mxu0 %v28
  %65 = vmatprep.subr.mxu0 %v31
  %66 = vmatpush1.msra.mxu0 %v30
  %67 = vmatprep.subr.mxu0 %v33
  %68 = vmatpush1.msra.mxu0 %v32
  %69 = vmatprep.subr.mxu0 %v35
  %70 = vmatpush1.msra.mxu0 %v34
  %71 = vmatprep.subr.mxu0 %v37
  %72 = vmatpush1.msra.mxu0 %v36
  %73 = vmatprep.subr.mxu0 %v39
  %74 = vmatpush1.msra.mxu0 %v38
  %75 = vmatprep.subr.mxu0 %v41
  %76 = vmatpush1.msra.mxu0 %v40
  %77 = vmatprep.subr.mxu0 %v43
  %78 = vmatpush1.msra.mxu0 %v42
  %79 = vmatprep.subr.mxu0 %v45
  %80 = vmatpush1.msra.mxu0 %v44
  %81 = vmatprep.subr.mxu0 0.0
  %82 = vmatpush1.msra.mxu0 0.0
  %83 = vmatprep.subr.mxu0 0.0
  %84 = vmatpush1.msra.mxu0 0.0
  %85 = vmatprep.subr.mxu0 0.0
  %86 = vmatpush1.msra.mxu0 0.0
  %87 = vmatprep.subr.mxu0 0.0
  %88 = vmatpush1.msra.mxu0 0.0
  %89 = vmatprep.subr.mxu0 0.0
  %90 = vmatpush1.msra.mxu0 0.0
  %91 = vmatprep.subr.mxu0 0.0
  %92 = vmatpush1.msra.mxu0 0.0
  %93 = vmatprep.subr.mxu0 0.0
  %94 = vmatpush1.msra.mxu0 0.0
  %95 = vmatprep.subr.mxu0 0.0
  %96 = vmatpush1.msra.mxu0 0.0
  %97 = vmatprep.subr.mxu0 0.0
  %98 = vmatpush1.msra.mxu0 0.0
  %99 = vmatprep.subr.mxu0 0.0
  %100 = vmatpush1.msra.mxu0 0.0
  %101 = vmatprep.subr.mxu0 0.0
  %102 = vmatpush1.msra.mxu0 0.0
  %103 = vmatprep.subr.mxu0 0.0
  %104 = vmatpush1.msra.mxu0 0.0
  %105 = vmatprep.subr.mxu0 0.0
  %106 = vmatpush1.msra.mxu0 0.0
  %107 = vmatprep.subr.mxu0 0.0
  %108 = vmatpush1.msra.mxu0 0.0
  %109 = vmatprep.subr.mxu0 0.0
  %110 = vmatpush1.msra.mxu0 0.0
  %111 = vmatprep.subr.mxu0 0.0
  %112 = vmatpush1.msra.mxu0 0.0
  %113 = vmatprep.mubr.f32.mxu0 0.0
  %114 = vmatmul.mubr.f32.gmra.mrb[0].mxu0 %v48
  %v115 = vpop.f32.mrb[0].mxu0
  %v116 = vadd.f32 0.0, %v115
  %v117 = vpop.f32.mrb[0].mxu0
  %v118 = vadd.f32 0.0, %v117
  %119 = vdwg.mxu0
  %v121 = vlaneseq
  %v122 = vshrl.u32 %v121, 7
  %v123 = vsub.s32 0, %v122
  %v124 = vrot.slane %v46, %v123
  %v126 = vadd.f32 %v118, %v124
  %127 = vst [vmem:[%s3] sm:$0x3] %v126
  %s128 = scalar_lea.vmem %s0, 2
  %v129 = vld [vmem:[%s128] sm:$0x3]
  %v130 = vadd.f32 %v129, %v116
  %v131 = vtanh.pop %v130
  %132 = vmatprep.subr.mxu0 %v15
  %133 = vmatpush1.msra.mxu0 %v14
  %134 = vmatprep.subr.mxu0 %v17
  %135 = vmatpush1.msra.mxu0 %v16
  %136 = vmatprep.subr.mxu0 %v19
  %137 = vmatpush1.msra.mxu0 %v18
  %138 = vmatprep.subr.mxu0 %v21
  %139 = vmatpush1.msra.mxu0 %v20
  %140 = vmatprep.subr.mxu0 %v23
  %141 = vmatpush1.msra.mxu0 %v22
  %142 = vmatprep.subr.mxu0 %v25
  %143 = vmatpush1.msra.mxu0 %v24
  %144 = vmatprep.subr.mxu0 %v27
  %145 = vmatpush1.msra.mxu0 %v26
  %146 = vmatprep.subr.mxu0 %v29
  %147 = vmatpush1.msra.mxu0 %v28
  %148 = vmatprep.subr.mxu0 %v31
  %149 = vmatpush1.msra.mxu0 %v30
  %150 = vmatprep.subr.mxu0 %v33
  %151 = vmatpush1.msra.mxu0 %v32
  %152 = vmatprep.subr.mxu0 %v35
  %153 = vmatpush1.msra.mxu0 %v34
  %154 = vmatprep.subr.mxu0 %v37
  %155 = vmatpush1.msra.mxu0 %v36
  %156 = vmatprep.subr.mxu0 %v39
  %157 = vmatpush1.msra.mxu0 %v38
  %158 = vmatprep.subr.mxu0 %v41
  %159 = vmatpush1.msra.mxu0 %v40
  %160 = vmatprep.subr.mxu0 %v43
  %161 = vmatpush1.msra.mxu0 %v42
  %162 = vmatprep.subr.mxu0 %v45
  %163 = vmatpush1.msra.mxu0 %v44
  %164 = vmatprep.subr.mxu0 0.0
  %165 = vmatpush1.msra.mxu0 0.0
  %166 = vmatprep.subr.mxu0 0.0
  %167 = vmatpush1.msra.mxu0 0.0
  %168 = vmatprep.subr.mxu0 0.0
  %169 = vmatpush1.msra.mxu0 0.0
  %170 = vmatprep.subr.mxu0 0.0
  %171 = vmatpush1.msra.mxu0 0.0
  %172 = vmatprep.subr.mxu0 0.0
  %173 = vmatpush1.msra.mxu0 0.0
  %174 = vmatprep.subr.mxu0 0.0
  %175 = vmatpush1.msra.mxu0 0.0
  %176 = vmatprep.subr.mxu0 0.0
  %177 = vmatpush1.msra.mxu0 0.0
  %178 = vmatprep.subr.mxu0 0.0
  %179 = vmatpush1.msra.mxu0 0.0
  %180 = vmatprep.subr.mxu0 0.0
  %181 = vmatpush1.msra.mxu0 0.0
  %182 = vmatprep.subr.mxu0 0.0
  %183 = vmatpush1.msra.mxu0 0.0
  %184 = vmatprep.subr.mxu0 0.0
  %185 = vmatpush1.msra.mxu0 0.0
  %186 = vmatprep.subr.mxu0 0.0
  %187 = vmatpush1.msra.mxu0 0.0
  %188 = vmatprep.subr.mxu0 0.0
  %189 = vmatpush1.msra.mxu0 0.0
  %190 = vmatprep.subr.mxu0 0.0
  %191 = vmatpush1.msra.mxu0 0.0
  %192 = vmatprep.subr.mxu0 0.0
  %193 = vmatpush1.msra.mxu0 0.0
  %194 = vmatprep.subr.mxu0 0.0
  %195 = vmatpush1.msra.mxu0 0.0
  %196 = vmatprep.mubr.f32.mxu0 0.0
  %197 = vmatmul.mubr.f32.gmra.mrb[0].mxu0 %v131
  %v198 = vpop.f32.mrb[0].mxu0
  %v199 = vadd.f32 0.0, %v198
  %v200 = vpop.f32.mrb[0].mxu0
  %v201 = vadd.f32 0.0, %v200
  %202 = vdwg.mxu0
  %v203 = vadd.f32 %v201, %v124
  %s204 = scalar_lea.vmem %s3, 2
  %205 = vst [vmem:[%s204] sm:$0x3] %v203
  %s206 = scalar_lea.vmem %s0, 4
  %v207 = vld [vmem:[%s206] sm:$0x3]
  %v208 = vadd.f32 %v207, %v199
  %v209 = vtanh.pop %v208
  %210 = vmatprep.subr.mxu0 %v15
  %211 = vmatpush1.msra.mxu0 %v14
  %212 = vmatprep.subr.mxu0 %v17
  %213 = vmatpush1.msra.mxu0 %v16
  %214 = vmatprep.subr.mxu0 %v19
  %215 = vmatpush1.msra.mxu0 %v18
  %216 = vmatprep.subr.mxu0 %v21
  %217 = vmatpush1.msra.mxu0 %v20
  %218 = vmatprep.subr.mxu0 %v23
  %219 = vmatpush1.msra.mxu0 %v22
  %220 = vmatprep.subr.mxu0 %v25
  %221 = vmatpush1.msra.mxu0 %v24
  %222 = vmatprep.subr.mxu0 %v27
  %223 = vmatpush1.msra.mxu0 %v26
  %224 = vmatprep.subr.mxu0 %v29
  %225 = vmatpush1.msra.mxu0 %v28
  %226 = vmatprep.subr.mxu0 %v31
  %227 = vmatpush1.msra.mxu0 %v30
  %228 = vmatprep.subr.mxu0 %v33
  %229 = vmatpush1.msra.mxu0 %v32
  %230 = vmatprep.subr.mxu0 %v35
  %231 = vmatpush1.msra.mxu0 %v34
  %232 = vmatprep.subr.mxu0 %v37
  %233 = vmatpush1.msra.mxu0 %v36
  %234 = vmatprep.subr.mxu0 %v39
  %235 = vmatpush1.msra.mxu0 %v38
  %236 = vmatprep.subr.mxu0 %v41
  %237 = vmatpush1.msra.mxu0 %v40
  %238 = vmatprep.subr.mxu0 %v43
  %239 = vmatpush1.msra.mxu0 %v42
  %240 = vmatprep.subr.mxu0 %v45
  %241 = vmatpush1.msra.mxu0 %v44
  %242 = vmatprep.subr.mxu0 0.0
  %243 = vmatpush1.msra.mxu0 0.0
  %244 = vmatprep.subr.mxu0 0.0
  %245 = vmatpush1.msra.mxu0 0.0
  %246 = vmatprep.subr.mxu0 0.0
  %247 = vmatpush1.msra.mxu0 0.0
  %248 = vmatprep.subr.mxu0 0.0
  %249 = vmatpush1.msra.mxu0 0.0
  %250 = vmatprep.subr.mxu0 0.0
  %251 = vmatpush1.msra.mxu0 0.0
  %252 = vmatprep.subr.mxu0 0.0
  %253 = vmatpush1.msra.mxu0 0.0
  %254 = vmatprep.subr.mxu0 0.0
  %255 = vmatpush1.msra.mxu0 0.0
  %256 = vmatprep.subr.mxu0 0.0
  %257 = vmatpush1.msra.mxu0 0.0
  %258 = vmatprep.subr.mxu0 0.0
  %259 = vmatpush1.msra.mxu0 0.0
  %260 = vmatprep.subr.mxu0 0.0
  %261 = vmatpush1.msra.mxu0 0.0
  %262 = vmatprep.subr.mxu0 0.0
  %263 = vmatpush1.msra.mxu0 0.0
  %264 = vmatprep.subr.mxu0 0.0
  %265 = vmatpush1.msra.mxu0 0.0
  %266 = vmatprep.subr.mxu0 0.0
  %267 = vmatpush1.msra.mxu0 0.0
  %268 = vmatprep.subr.mxu0 0.0
  %269 = vmatpush1.msra.mxu0 0.0
  %270 = vmatprep.subr.mxu0 0.0
  %271 = vmatpush1.msra.mxu0 0.0
  %272 = vmatprep.subr.mxu0 0.0
  %273 = vmatpush1.msra.mxu0 0.0
  %274 = vmatprep.mubr.f32.mxu0 0.0
  %275 = vmatmul.mubr.f32.gmra.mrb[0].mxu0 %v209
  %v276 = vpop.f32.mrb[0].mxu0
  %v277 = vadd.f32 0.0, %v276
  %v278 = vpop.f32.mrb[0].mxu0
  %v279 = vadd.f32 0.0, %v278
  %280 = vdwg.mxu0
  %v281 = vadd.f32 %v279, %v124
  %s282 = scalar_lea.vmem %s3, 4
  %283 = vst [vmem:[%s282] sm:$0x3] %v281
  %s284 = scalar_lea.vmem %s0, 6
  %v285 = vld [vmem:[%s284] sm:$0x3]
  %v286 = vadd.f32 %v285, %v277
  %v287 = vtanh.pop %v286
  %288 = vmatprep.subr.mxu0 %v15
  %289 = vmatpush1.msra.mxu0 %v14
  %290 = vmatprep.subr.mxu0 %v17
  %291 = vmatpush1.msra.mxu0 %v16
  %292 = vmatprep.subr.mxu0 %v19
  %293 = vmatpush1.msra.mxu0 %v18
  %294 = vmatprep.subr.mxu0 %v21
  %295 = vmatpush1.msra.mxu0 %v20
  %296 = vmatprep.subr.mxu0 %v23
  %297 = vmatpush1.msra.mxu0 %v22
  %298 = vmatprep.subr.mxu0 %v25
  %299 = vmatpush1.msra.mxu0 %v24
  %300 = vmatprep.subr.mxu0 %v27
  %301 = vmatpush1.msra.mxu0 %v26
  %302 = vmatprep.subr.mxu0 %v29
  %303 = vmatpush1.msra.mxu0 %v28
  %304 = vmatprep.subr.mxu0 %v31
  %305 = vmatpush1.msra.mxu0 %v30
  %306 = vmatprep.subr.mxu0 %v33
  %307 = vmatpush1.msra.mxu0 %v32
  %308 = vmatprep.subr.mxu0 %v35
  %309 = vmatpush1.msra.mxu0 %v34
  %310 = vmatprep.subr.mxu0 %v37
  %311 = vmatpush1.msra.mxu0 %v36
  %312 = vmatprep.subr.mxu0 %v39
  %313 = vmatpush1.msra.mxu0 %v38
  %314 = vmatprep.subr.mxu0 %v41
  %315 = vmatpush1.msra.mxu0 %v40
  %316 = vmatprep.subr.mxu0 %v43
  %317 = vmatpush1.msra.mxu0 %v42
  %318 = vmatprep.subr.mxu0 %v45
  %319 = vmatpush1.msra.mxu0 %v44
  %320 = vmatprep.subr.mxu0 0.0
  %321 = vmatpush1.msra.mxu0 0.0
  %322 = vmatprep.subr.mxu0 0.0
  %323 = vmatpush1.msra.mxu0 0.0
  %324 = vmatprep.subr.mxu0 0.0
  %325 = vmatpush1.msra.mxu0 0.0
  %326 = vmatprep.subr.mxu0 0.0
  %327 = vmatpush1.msra.mxu0 0.0
  %328 = vmatprep.subr.mxu0 0.0
  %329 = vmatpush1.msra.mxu0 0.0
  %330 = vmatprep.subr.mxu0 0.0
  %331 = vmatpush1.msra.mxu0 0.0
  %332 = vmatprep.subr.mxu0 0.0
  %333 = vmatpush1.msra.mxu0 0.0
  %334 = vmatprep.subr.mxu0 0.0
  %335 = vmatpush1.msra.mxu0 0.0
  %336 = vmatprep.subr.mxu0 0.0
  %337 = vmatpush1.msra.mxu0 0.0
  %338 = vmatprep.subr.mxu0 0.0
  %339 = vmatpush1.msra.mxu0 0.0
  %340 = vmatprep.subr.mxu0 0.0
  %341 = vmatpush1.msra.mxu0 0.0
  %342 = vmatprep.subr.mxu0 0.0
  %343 = vmatpush1.msra.mxu0 0.0
  %344 = vmatprep.subr.mxu0 0.0
  %345 = vmatpush1.msra.mxu0 0.0
  %346 = vmatprep.subr.mxu0 0.0
  %347 = vmatpush1.msra.mxu0 0.0
  %348 = vmatprep.subr.mxu0 0.0
  %349 = vmatpush1.msra.mxu0 0.0
  %350 = vmatprep.subr.mxu0 0.0
  %351 = vmatpush1.msra.mxu0 0.0
  %352 = vmatprep.mubr.f32.mxu0 0.0
  %353 = vmatmul.mubr.f32.gmra.mrb[0].mxu0 %v287
  %v354 = vpop.f32.mrb[0].mxu0
  %v355 = vadd.f32 0.0, %v354
  %v356 = vpop.f32.mrb[0].mxu0
  %v357 = vadd.f32 0.0, %v356
  %358 = vdwg.mxu0
  %v359 = vadd.f32 %v357, %v124
  %s360 = scalar_lea.vmem %s3, 6
  %361 = vst [vmem:[%s360] sm:$0x3] %v359
  %s362 = scalar_lea.vmem %s0, 8
  %v363 = vld [vmem:[%s362] sm:$0x3]
  %v364 = vadd.f32 %v363, %v355
  %v365 = vtanh.pop %v364
  %366 = vmatprep.subr.mxu0 %v15
  %367 = vmatpush1.msra.mxu0 %v14
  %368 = vmatprep.subr.mxu0 %v17
  %369 = vmatpush1.msra.mxu0 %v16
  %370 = vmatprep.subr.mxu0 %v19
  %371 = vmatpush1.msra.mxu0 %v18
  %372 = vmatprep.subr.mxu0 %v21
  %373 = vmatpush1.msra.mxu0 %v20
  %374 = vmatprep.subr.mxu0 %v23
  %375 = vmatpush1.msra.mxu0 %v22
  %376 = vmatprep.subr.mxu0 %v25
  %377 = vmatpush1.msra.mxu0 %v24
  %378 = vmatprep.subr.mxu0 %v27
  %379 = vmatpush1.msra.mxu0 %v26
  %380 = vmatprep.subr.mxu0 %v29
  %381 = vmatpush1.msra.mxu0 %v28
  %382 = vmatprep.subr.mxu0 %v31
  %383 = vmatpush1.msra.mxu0 %v30
  %384 = vmatprep.subr.mxu0 %v33
  %385 = vmatpush1.msra.mxu0 %v32
  %386 = vmatprep.subr.mxu0 %v35
  %387 = vmatpush1.msra.mxu0 %v34
  %388 = vmatprep.subr.mxu0 %v37
  %389 = vmatpush1.msra.mxu0 %v36
  %390 = vmatprep.subr.mxu0 %v39
  %391 = vmatpush1.msra.mxu0 %v38
  %392 = vmatprep.subr.mxu0 %v41
  %393 = vmatpush1.msra.mxu0 %v40
  %394 = vmatprep.subr.mxu0 %v43
  %395 = vmatpush1.msra.mxu0 %v42
  %396 = vmatprep.subr.mxu0 %v45
  %397 = vmatpush1.msra.mxu0 %v44
  %398 = vmatprep.subr.mxu0 0.0
  %399 = vmatpush1.msra.mxu0 0.0
  %400 = vmatprep.subr.mxu0 0.0
  %401 = vmatpush1.msra.mxu0 0.0
  %402 = vmatprep.subr.mxu0 0.0
  %403 = vmatpush1.msra.mxu0 0.0
  %404 = vmatprep.subr.mxu0 0.0
  %405 = vmatpush1.msra.mxu0 0.0
  %406 = vmatprep.subr.mxu0 0.0
  %407 = vmatpush1.msra.mxu0 0.0
  %408 = vmatprep.subr.mxu0 0.0
  %409 = vmatpush1.msra.mxu0 0.0
  %410 = vmatprep.subr.mxu0 0.0
  %411 = vmatpush1.msra.mxu0 0.0
  %412 = vmatprep.subr.mxu0 0.0
  %413 = vmatpush1.msra.mxu0 0.0
  %414 = vmatprep.subr.mxu0 0.0
  %415 = vmatpush1.msra.mxu0 0.0
  %416 = vmatprep.subr.mxu0 0.0
  %417 = vmatpush1.msra.mxu0 0.0
  %418 = vmatprep.subr.mxu0 0.0
  %419 = vmatpush1.msra.mxu0 0.0
  %420 = vmatprep.subr.mxu0 0.0
  %421 = vmatpush1.msra.mxu0 0.0
  %422 = vmatprep.subr.mxu0 0.0
  %423 = vmatpush1.msra.mxu0 0.0
  %424 = vmatprep.subr.mxu0 0.0
  %425 = vmatpush1.msra.mxu0 0.0
  %426 = vmatprep.subr.mxu0 0.0
  %427 = vmatpush1.msra.mxu0 0.0
  %428 = vmatprep.subr.mxu0 0.0
  %429 = vmatpush1.msra.mxu0 0.0
  %430 = vmatprep.mubr.f32.mxu0 0.0
  %431 = vmatmul.mubr.f32.gmra.mrb[0].mxu0 %v365
  %v432 = vpop.f32.mrb[0].mxu0
  %v433 = vadd.f32 0.0, %v432
  %v434 = vpop.f32.mrb[0].mxu0
  %v435 = vadd.f32 0.0, %v434
  %436 = vdwg.mxu0
  %v437 = vadd.f32 %v435, %v124
  %s438 = scalar_lea.vmem %s3, 8
  %439 = vst [vmem:[%s438] sm:$0x3] %v437
  %s440 = scalar_lea.vmem %s0, 10
  %v441 = vld [vmem:[%s440] sm:$0x3]
  %v442 = vadd.f32 %v441, %v433
  %v443 = vtanh.pop %v442
  %444 = vmatprep.subr.mxu0 %v15
  %445 = vmatpush1.msra.mxu0 %v14
  %446 = vmatprep.subr.mxu0 %v17
  %447 = vmatpush1.msra.mxu0 %v16
  %448 = vmatprep.subr.mxu0 %v19
  %449 = vmatpush1.msra.mxu0 %v18
  %450 = vmatprep.subr.mxu0 %v21
  %451 = vmatpush1.msra.mxu0 %v20
  %452 = vmatprep.subr.mxu0 %v23
  %453 = vmatpush1.msra.mxu0 %v22
  %454 = vmatprep.subr.mxu0 %v25
  %455 = vmatpush1.msra.mxu0 %v24
  %456 = vmatprep.subr.mxu0 %v27
  %457 = vmatpush1.msra.mxu0 %v26
  %458 = vmatprep.subr.mxu0 %v29
  %459 = vmatpush1.msra.mxu0 %v28
  %460 = vmatprep.subr.mxu0 %v31
  %461 = vmatpush1.msra.mxu0 %v30
  %462 = vmatprep.subr.mxu0 %v33
  %463 = vmatpush1.msra.mxu0 %v32
  %464 = vmatprep.subr.mxu0 %v35
  %465 = vmatpush1.msra.mxu0 %v34
  %466 = vmatprep.subr.mxu0 %v37
  %467 = vmatpush1.msra.mxu0 %v36
  %468 = vmatprep.subr.mxu0 %v39
  %469 = vmatpush1.msra.mxu0 %v38
  %470 = vmatprep.subr.mxu0 %v41
  %471 = vmatpush1.msra.mxu0 %v40
  %472 = vmatprep.subr.mxu0 %v43
  %473 = vmatpush1.msra.mxu0 %v42
  %474 = vmatprep.subr.mxu0 %v45
  %475 = vmatpush1.msra.mxu0 %v44
  %476 = vmatprep.subr.mxu0 0.0
  %477 = vmatpush1.msra.mxu0 0.0
  %478 = vmatprep.subr.mxu0 0.0
  %479 = vmatpush1.msra.mxu0 0.0
  %480 = vmatprep.subr.mxu0 0.0
  %481 = vmatpush1.msra.mxu0 0.0
  %482 = vmatprep.subr.mxu0 0.0
  %483 = vmatpush1.msra.mxu0 0.0
  %484 = vmatprep.subr.mxu0 0.0
  %485 = vmatpush1.msra.mxu0 0.0
  %486 = vmatprep.subr.mxu0 0.0
  %487 = vmatpush1.msra.mxu0 0.0
  %488 = vmatprep.subr.mxu0 0.0
  %489 = vmatpush1.msra.mxu0 0.0
  %490 = vmatprep.subr.mxu0 0.0
  %491 = vmatpush1.msra.mxu0 0.0
  %492 = vmatprep.subr.mxu0 0.0
  %493 = vmatpush1.msra.mxu0 0.0
  %494 = vmatprep.subr.mxu0 0.0
  %495 = vmatpush1.msra.mxu0 0.0
  %496 = vmatprep.subr.mxu0 0.0
  %497 = vmatpush1.msra.mxu0 0.0
  %498 = vmatprep.subr.mxu0 0.0
  %499 = vmatpush1.msra.mxu0 0.0
  %500 = vmatprep.subr.mxu0 0.0
  %501 = vmatpush1.msra.mxu0 0.0
  %502 = vmatprep.subr.mxu0 0.0
  %503 = vmatpush1.msra.mxu0 0.0
  %504 = vmatprep.subr.mxu0 0.0
  %505 = vmatpush1.msra.mxu0 0.0
  %506 = vmatprep.subr.mxu0 0.0
  %507 = vmatpush1.msra.mxu0 0.0
  %508 = vmatprep.mubr.f32.mxu0 0.0
  %509 = vmatmul.mubr.f32.gmra.mrb[0].mxu0 %v443
  %v510 = vpop.f32.mrb[0].mxu0
  %v511 = vadd.f32 0.0, %v510
  %v512 = vpop.f32.mrb[0].mxu0
  %v513 = vadd.f32 0.0, %v512
  %514 = vdwg.mxu0
  %v515 = vadd.f32 %v513, %v124
  %s516 = scalar_lea.vmem %s3, 10
  %517 = vst [vmem:[%s516] sm:$0x3] %v515
  %s518 = scalar_lea.vmem %s0, 12
  %v519 = vld [vmem:[%s518] sm:$0x3]
  %v520 = vadd.f32 %v519, %v511
  %v521 = vtanh.pop %v520
  %522 = vmatprep.subr.mxu0 %v15
  %523 = vmatpush1.msra.mxu0 %v14
  %524 = vmatprep.subr.mxu0 %v17
  %525 = vmatpush1.msra.mxu0 %v16
  %526 = vmatprep.subr.mxu0 %v19
  %527 = vmatpush1.msra.mxu0 %v18
  %528 = vmatprep.subr.mxu0 %v21
  %529 = vmatpush1.msra.mxu0 %v20
  %530 = vmatprep.subr.mxu0 %v23
  %531 = vmatpush1.msra.mxu0 %v22
  %532 = vmatprep.subr.mxu0 %v25
  %533 = vmatpush1.msra.mxu0 %v24
  %534 = vmatprep.subr.mxu0 %v27
  %535 = vmatpush1.msra.mxu0 %v26
  %536 = vmatprep.subr.mxu0 %v29
  %537 = vmatpush1.msra.mxu0 %v28
  %538 = vmatprep.subr.mxu0 %v31
  %539 = vmatpush1.msra.mxu0 %v30
  %540 = vmatprep.subr.mxu0 %v33
  %541 = vmatpush1.msra.mxu0 %v32
  %542 = vmatprep.subr.mxu0 %v35
  %543 = vmatpush1.msra.mxu0 %v34
  %544 = vmatprep.subr.mxu0 %v37
  %545 = vmatpush1.msra.mxu0 %v36
  %546 = vmatprep.subr.mxu0 %v39
  %547 = vmatpush1.msra.mxu0 %v38
  %548 = vmatprep.subr.mxu0 %v41
  %549 = vmatpush1.msra.mxu0 %v40
  %550 = vmatprep.subr.mxu0 %v43
  %551 = vmatpush1.msra.mxu0 %v42
  %552 = vmatprep.subr.mxu0 %v45
  %553 = vmatpush1.msra.mxu0 %v44
  %554 = vmatprep.subr.mxu0 0.0
  %555 = vmatpush1.msra.mxu0 0.0
  %556 = vmatprep.subr.mxu0 0.0
  %557 = vmatpush1.msra.mxu0 0.0
  %558 = vmatprep.subr.mxu0 0.0
  %559 = vmatpush1.msra.mxu0 0.0
  %560 = vmatprep.subr.mxu0 0.0
  %561 = vmatpush1.msra.mxu0 0.0
  %562 = vmatprep.subr.mxu0 0.0
  %563 = vmatpush1.msra.mxu0 0.0
  %564 = vmatprep.subr.mxu0 0.0
  %565 = vmatpush1.msra.mxu0 0.0
  %566 = vmatprep.subr.mxu0 0.0
  %567 = vmatpush1.msra.mxu0 0.0
  %568 = vmatprep.subr.mxu0 0.0
  %569 = vmatpush1.msra.mxu0 0.0
  %570 = vmatprep.subr.mxu0 0.0
  %571 = vmatpush1.msra.mxu0 0.0
  %572 = vmatprep.subr.mxu0 0.0
  %573 = vmatpush1.msra.mxu0 0.0
  %574 = vmatprep.subr.mxu0 0.0
  %575 = vmatpush1.msra.mxu0 0.0
  %576 = vmatprep.subr.mxu0 0.0
  %577 = vmatpush1.msra.mxu0 0.0
  %578 = vmatprep.subr.mxu0 0.0
  %579 = vmatpush1.msra.mxu0 0.0
  %580 = vmatprep.subr.mxu0 0.0
  %581 = vmatpush1.msra.mxu0 0.0
  %582 = vmatprep.subr.mxu0 0.0
  %583 = vmatpush1.msra.mxu0 0.0
  %584 = vmatprep.subr.mxu0 0.0
  %585 = vmatpush1.msra.mxu0 0.0
  %586 = vmatprep.mubr.f32.mxu0 0.0
  %587 = vmatmul.mubr.f32.gmra.mrb[0].mxu0 %v521
  %v588 = vpop.f32.mrb[0].mxu0
  %v589 = vadd.f32 0.0, %v588
  %v590 = vpop.f32.mrb[0].mxu0
  %v591 = vadd.f32 0.0, %v590
  %592 = vdwg.mxu0
  %v593 = vadd.f32 %v591, %v124
  %s594 = scalar_lea.vmem %s3, 12
  %595 = vst [vmem:[%s594] sm:$0x3] %v593
  %s596 = scalar_lea.vmem %s0, 14
  %v597 = vld [vmem:[%s596] sm:$0x3]
  %v598 = vadd.f32 %v597, %v589
  %v599 = vtanh.pop %v598
  %600 = vmatprep.subr.mxu0 0.0
  %601 = vmatpush1.msra.mxu0 %v15
  %602 = vmatprep.subr.mxu0 0.0
  %603 = vmatpush1.msra.mxu0 %v17
  %604 = vmatprep.subr.mxu0 0.0
  %605 = vmatpush1.msra.mxu0 %v19
  %606 = vmatprep.subr.mxu0 0.0
  %607 = vmatpush1.msra.mxu0 %v21
  %608 = vmatprep.subr.mxu0 0.0
  %609 = vmatpush1.msra.mxu0 %v23
  %610 = vmatprep.subr.mxu0 0.0
  %611 = vmatpush1.msra.mxu0 %v25
  %612 = vmatprep.subr.mxu0 0.0
  %613 = vmatpush1.msra.mxu0 %v27
  %614 = vmatprep.subr.mxu0 0.0
  %615 = vmatpush1.msra.mxu0 %v29
  %616 = vmatprep.subr.mxu0 0.0
  %617 = vmatpush1.msra.mxu0 %v31
  %618 = vmatprep.subr.mxu0 0.0
  %619 = vmatpush1.msra.mxu0 %v33
  %620 = vmatprep.subr.mxu0 0.0
  %621 = vmatpush1.msra.mxu0 %v35
  %622 = vmatprep.subr.mxu0 0.0
  %623 = vmatpush1.msra.mxu0 %v37
  %624 = vmatprep.subr.mxu0 0.0
  %625 = vmatpush1.msra.mxu0 %v39
  %626 = vmatprep.subr.mxu0 0.0
  %627 = vmatpush1.msra.mxu0 %v41
  %628 = vmatprep.subr.mxu0 0.0
  %629 = vmatpush1.msra.mxu0 %v43
  %630 = vmatprep.subr.mxu0 0.0
  %631 = vmatpush1.msra.mxu0 %v45
  %632 = vmatprep.subr.mxu0 0.0
  %633 = vmatpush1.msra.mxu0 0.0
  %634 = vmatprep.subr.mxu0 0.0
  %635 = vmatpush1.msra.mxu0 0.0
  %636 = vmatprep.subr.mxu0 0.0
  %637 = vmatpush1.msra.mxu0 0.0
  %638 = vmatprep.subr.mxu0 0.0
  %639 = vmatpush1.msra.mxu0 0.0
  %640 = vmatprep.subr.mxu0 0.0
  %641 = vmatpush1.msra.mxu0 0.0
  %642 = vmatprep.subr.mxu0 0.0
  %643 = vmatpush1.msra.mxu0 0.0
  %644 = vmatprep.subr.mxu0 0.0
  %645 = vmatpush1.msra.mxu0 0.0
  %646 = vmatprep.subr.mxu0 0.0
  %647 = vmatpush1.msra.mxu0 0.0
  %648 = vmatprep.subr.mxu0 0.0
  %649 = vmatpush1.msra.mxu0 0.0
  %650 = vmatprep.subr.mxu0 0.0
  %651 = vmatpush1.msra.mxu0 0.0
  %652 = vmatprep.subr.mxu0 0.0
  %653 = vmatpush1.msra.mxu0 0.0
  %654 = vmatprep.subr.mxu0 0.0
  %655 = vmatpush1.msra.mxu0 0.0
  %656 = vmatprep.subr.mxu0 0.0
  %657 = vmatpush1.msra.mxu0 0.0
  %658 = vmatprep.subr.mxu0 0.0
  %659 = vmatpush1.msra.mxu0 0.0
  %660 = vmatprep.subr.mxu0 0.0
  %661 = vmatpush1.msra.mxu0 0.0
  %662 = vmatprep.subr.mxu0 0.0
  %663 = vmatpush1.msra.mxu0 0.0
  %664 = vmatprep.mubr.f32.mxu0 0.0
  %665 = vmatmul.mubr.f32.gmra.mrb[0].mxu0 %v599
  %v666 = vpop.f32.mrb[0].mxu0
  %v667 = vadd.f32 %v124, %v666
  %v668 = vpop.f32.mrb[0].mxu0
  %669 = vdwg.mxu0
  %s670 = scalar_lea.vmem %s3, 14
  %671 = vst [vmem:[%s670] sm:$0x3] %v667
  // Predicated region
  $region14: #{spatial_temporal_nn.3} parent=0 // pred_check
    _
  $region15: #{spatial_temporal_nn.3} parent=0 // pred_check_branch
    %673 = sbr.rel (0) target = $region17
  $region16: #{spatial_temporal_nn.3} parent=0 // pred_region
    _
  $region17: #{spatial_temporal_nn.3} parent=0 // pred_fallthru
    _
  // Predicated region
  $region18: #{spatial_temporal_nn.3} parent=0 // pred_check
    _
  $region19: #{spatial_temporal_nn.3} parent=0 // pred_check_branch
    %675 = sbr.rel (0) target = $region21
  $region20: #{spatial_temporal_nn.3} parent=0 // pred_region
    _
  $region21: #{spatial_temporal_nn.3} parent=0 // pred_fallthru
    _

</llo_original>
